<compile_context>
chip_gen: v7x
topology: tpu7x:2x2x1
jax: 0.10.0
libtpu: 0.0.40
codegen_flags: <defaults>
</compile_context>

<pallas_src>
import functools

import jax
import jax.numpy as jnp
from jax.experimental import pallas as pl
from jax.experimental.pallas import tpu as pltpu


# --------------------------------------------------------------------------- #
# Kernel
# --------------------------------------------------------------------------- #
def _context_kernel(inv_s, seq_rem,
                    flags_ref, feat_ref, mask_ref,
                    w1_ref, b1_ref, w2_ref, b2_ref,
                    out_ref, acc_ref):
    """Grid = (batch_tile, seq_tile).

    flags_ref: (num_batch_tiles,) int32 SMEM (scalar prefetch, per-tile mask.any())
    feat_ref:  (tB, tS, H) native dtype     mask_ref: (tB, 1) f32
    w1_ref:    (H, Cp) bf16  b1_ref: (1, Cp) f32
    w2_ref:    (Cp, H) bf16  b2_ref: (1, H) f32
    out_ref:   (tB, H) f32                  acc_ref:  (tB, H) f32 scratch
    """
    b = pl.program_id(0)
    s = pl.program_id(1)
    ns = pl.num_programs(1)
    active = flags_ref[b] != 0

    @pl.when(s == 0)
    def _init():
        acc_ref[...] = jnp.zeros_like(acc_ref)

    def _accum(x):
        # Native-dtype reduce over the seq tile; one promote per (tB, H) result
        # (avoids a per-element f32 cast on the streamed data).
        acc_ref[...] += jnp.sum(x, axis=1).astype(jnp.float32)

    @pl.when(active)
    def _stream():
        if seq_rem:  # static: S % tS != 0 -> mask only the tail tile
            @pl.when(s != ns - 1)
            def _full_tile():
                _accum(feat_ref[...])

            @pl.when(s == ns - 1)
            def _tail_tile():
                x = feat_ref[...]
                row = jax.lax.broadcasted_iota(jnp.int32, x.shape, 1)
                _accum(jnp.where(row < seq_rem, x, jnp.zeros_like(x)))
        else:
            _accum(feat_ref[...])

    @pl.when(s == ns - 1)
    def _finalize():
        @pl.when(active)
        def _mlp():
            pooled = (acc_ref[...] * inv_s).astype(w1_ref.dtype)        # (tB, H)
            h = jnp.dot(pooled, w1_ref[...],
                        preferred_element_type=jnp.float32)
            h = jnp.maximum(h + b1_ref[...], 0.0).astype(w2_ref.dtype)  # (tB, Cp)
            out = jnp.dot(h, w2_ref[...],
                          preferred_element_type=jnp.float32) + b2_ref[...]
            out_ref[...] = (out * mask_ref[...]).astype(out_ref.dtype)  # (tB, H)

        @pl.when(jnp.logical_not(active))
        def _zeros():
            out_ref[...] = jnp.zeros_like(out_ref)


# --------------------------------------------------------------------------- #
# Helpers
# --------------------------------------------------------------------------- #
def _round_up(x, m):
    return ((x + m - 1) // m) * m


def _device_vmem_plan():
    """(vmem_limit_bytes, feat_block_budget_bytes) per TPU generation."""
    try:
        kind = jax.devices()[0].device_kind.lower()
    except Exception:  # interpret mode / unknown backend
        kind = ""
    if "7x" in kind or "v7" in kind:
        # v7x: 64 MiB physical VMEM -> keep blocks modest.
        return 48 * 1024 * 1024, 6 * 1024 * 1024
    if "v5" in kind or "v6" in kind:
        # v5e/v6e: 128 MiB physical -> raise scoped limit, bigger blocks.
        return 96 * 1024 * 1024, 8 * 1024 * 1024
    return 64 * 1024 * 1024, 6 * 1024 * 1024


def prepare_params(params, *, lane=128, weight_dtype=jnp.bfloat16):
    """Cast/pad weights ONCE: zero-pad context_dim to a multiple of 128 and store
    the matmul weights in bf16 (f32 accumulation keeps numerics close).  Padding
    is exact: padded fc1 columns yield relu(0)=0 and the matching fc2 rows are 0.
    """
    w1 = jnp.asarray(params["w1"], jnp.float32)          # (H, C)
    b1 = jnp.asarray(params["b1"], jnp.float32).reshape(-1)
    w2 = jnp.asarray(params["w2"], jnp.float32)          # (C, H)
    b2 = jnp.asarray(params["b2"], jnp.float32).reshape(-1)
    H, C = w1.shape
    Cp = _round_up(C, lane)
    if Cp != C:
        w1 = jnp.pad(w1, ((0, 0), (0, Cp - C)))
        b1 = jnp.pad(b1, (0, Cp - C))
        w2 = jnp.pad(w2, ((0, Cp - C), (0, 0)))
    return {"w1": w1.astype(weight_dtype), "b1": b1.reshape(1, Cp),
            "w2": w2.astype(weight_dtype), "b2": b2.reshape(1, H)}


def _encode_one(feat, mask, params, *, s_tile_target=512):
    """feat: (B, S, H) native dtype; mask: (B,) -> (B, H) f32 encoded context."""
    B, S, H = feat.shape
    w1, b1, w2, b2 = params["w1"], params["b1"], params["w2"], params["b2"]
    Cp = w1.shape[1]

    vmem_limit, feat_budget = _device_vmem_plan()

    # ---- tiling (divisor-free: cdiv grid + in-kernel tail masking) ----------
    tB = B if B <= 8 else 8
    itemsize = jnp.dtype(feat.dtype).itemsize
    # The streamed feat block is double-buffered by the pipeline -> budget / 2.
    rows = max(8, feat_budget // (2 * max(1, tB * H * itemsize)))
    tS = min(S, rows, max(8, int(s_tile_target)))
    if tS < S:
        tS = max(8, (tS // 8) * 8)          # (8, 128) sublane rule
    else:
        tS = S                              # full axis is always legal
    nb = pl.cdiv(B, tB)
    ns = pl.cdiv(S, tS)
    seq_rem = S % tS if tS < S else 0       # static tail length (0 -> no masking)

    # ---- traced mask.any() fast path: per-batch-tile activity flags ---------
    maskf = jnp.reshape(mask.astype(jnp.float32), (B, 1))
    valid = maskf[:, 0] != 0.0
    pad = nb * tB - B
    if pad:
        valid = jnp.pad(valid, (0, pad))
    flags = jnp.any(valid.reshape(nb, tB), axis=1).astype(jnp.int32)

    # NOTE: inv_s is a trace-time constant; a different S changes the grid anyway,
    # so this adds no extra retraces.
    kernel = functools.partial(_context_kernel, 1.0 / float(S), seq_rem)

    def feat_map(b, s, flags_ref):
        # Inactive batch tile -> pin to block (0, 0, 0): at most one feat DMA is
        # issued for the whole inactive region instead of streaming S/tS tiles.
        act = flags_ref[b] != 0
        return (jnp.where(act, b, 0), jnp.where(act, s, 0), 0)

    def _wspec(shape):
        # Constant index_map -> resident in VMEM; single-buffered (no need for 2x).
        return pl.BlockSpec(shape, lambda b, s, f: (0, 0),
                            pipeline_mode=pl.Buffered(1))

    return pl.pallas_call(
        kernel,
        out_shape=jax.ShapeDtypeStruct((B, H), jnp.float32),
        grid_spec=pltpu.PrefetchScalarGridSpec(
            num_scalar_prefetch=1,
            grid=(nb, ns),                  # batch tiles outermost (v7x 2-TC balance)
            in_specs=[
                pl.BlockSpec((tB, tS, H), feat_map),                  # streamed
                pl.BlockSpec((tB, 1), lambda b, s, f: (b, 0)),        # per-sample mask
                _wspec((H, Cp)),                                      # w1 (bf16)
                _wspec((1, Cp)),                                      # b1
                _wspec((Cp, H)),                                      # w2 (bf16)
                _wspec((1, H)),                                       # b2
            ],
            out_specs=pl.BlockSpec((tB, H), lambda b, s, f: (b, 0)),
            scratch_shapes=[pltpu.VMEM((tB, H), jnp.float32)],
        ),
        compiler_params=pltpu.CompilerParams(
            dimension_semantics=("parallel", "arbitrary"),
            vmem_limit_bytes=vmem_limit),
    )(flags, feat, maskf, w1, b1, w2, b2)


# --------------------------------------------------------------------------- #
# Forward (mirrors ContextEncoder.forward)
# --------------------------------------------------------------------------- #
def context_encoder_forward(visual_feat, audio_feat, hr_feat,
                            visual_mask, audio_mask, hr_mask, params,
                            *, s_tile_target=512):
    """Returns dict {'visual','audio','hr'} of (B, hidden_dim) f32 arrays.

    Fully traceable under jax.jit: the torch `mask.any()` fast path is realized
    on-device (scalar-prefetched flags), not via a host sync.
    """
    if params["b1"].ndim == 1:          # accept raw init_params output too
        params = prepare_params(params)

    modalities = [("visual", visual_feat, visual_mask),
                  ("audio", audio_feat, audio_mask),
                  ("hr", hr_feat, hr_mask)]

    encoded = {}
    for name, feat, mask in modalities:
        if feat is not None and mask is not None:
            encoded[name] = _encode_one(feat, mask, params,
                                        s_tile_target=s_tile_target)

    # Zero outputs for absent modalities; shape inference mirrors the torch code,
    # except the last-resort fallback uses the real hidden_dim from w2.
    present = [f for _, f, _ in modalities if f is not None]
    if present:
        b_fallback, _, h_fallback = present[0].shape
    else:
        h_fallback = params["w2"].shape[1]
        masks_present = [m for _, _, m in modalities if m is not None]
        b_fallback = masks_present[0].shape[0] if masks_present else 1

    for name, feat, _ in modalities:
        if name not in encoded:
            if feat is not None:
                b_d, _, h_d = feat.shape
            else:
                b_d, h_d = b_fallback, h_fallback
            encoded[name] = jnp.zeros((b_d, h_d), jnp.float32)

    return {name: encoded[name] for name, _, _ in modalities}


def init_params(key, hidden_dim, context_dim):
    """Deterministic init mimicking nn.Linear uniform(-1/sqrt(fan_in), +)."""
    k1, k2, k3, k4 = jax.random.split(key, 4)
    lim1 = 1.0 / jnp.sqrt(hidden_dim)
    lim2 = 1.0 / jnp.sqrt(context_dim)
    return {
        "w1": jax.random.uniform(k1, (hidden_dim, context_dim), jnp.float32, -lim1, lim1),
        "b1": jax.random.uniform(k2, (context_dim,), jnp.float32, -lim1, lim1),
        "w2": jax.random.uniform(k3, (context_dim, hidden_dim), jnp.float32, -lim2, lim2),
        "b2": jax.random.uniform(k4, (hidden_dim,), jnp.float32, -lim2, lim2),
    }


# --------------------------------------------------------------------------- #
# Demo + correctness check
# --------------------------------------------------------------------------- #
if __name__ == "__main__":
    B, S, H, C = 2, 16, 32, 16
    key = jax.random.PRNGKey(0)
    kp, kv, ka, kh = jax.random.split(key, 4)

    raw_params = init_params(kp, hidden_dim=H, context_dim=C)
    params = prepare_params(raw_params)          # cast (bf16) + pad once

    visual_feat = jax.random.normal(kv, (B, S, H), jnp.float32)
    audio_feat = jax.random.normal(ka, (B, S, H), jnp.float32)
    hr_feat = jax.random.normal(kh, (B, S, H), jnp.float32)

    visual_mask = jnp.array([1.0, 1.0], jnp.float32)
    audio_mask = jnp.array([1.0, 0.0], jnp.float32)
    hr_mask = jnp.array([0.0, 0.0], jnp.float32)   # all-invalid -> on-device skip

    # s_tile_target=8 forces two sequence tiles at these tiny shapes so the
    # accumulator / multi-step pipeline path is actually exercised.  Jitted to
    # demonstrate the fast path no longer needs a host sync.
    fwd = jax.jit(functools.partial(context_encoder_forward, s_tile_target=8))
    out = fwd(visual_feat, audio_feat, hr_feat,
              visual_mask, audio_mask, hr_mask, params)
    out = jax.tree_util.tree_map(jax.block_until_ready, out)

    # Pure-JAX f32 reference against the ORIGINAL (unpadded, f32) weights.
    # bf16 weight storage in the kernel -> loose tolerance.
    def ref(feat, mask):
        pooled = jnp.mean(feat, axis=1)
        h = jnp.maximum(pooled @ raw_params["w1"] + raw_params["b1"], 0.0)
        return (h @ raw_params["w2"] + raw_params["b2"]) * mask[:, None]

    assert out["visual"].shape == (B, H)
    assert out["audio"].shape == (B, H)
    assert out["hr"].shape == (B, H)
    assert jnp.allclose(out["visual"], ref(visual_feat, visual_mask), atol=3e-2, rtol=3e-2)
    assert jnp.allclose(out["audio"], ref(audio_feat, audio_mask), atol=3e-2, rtol=3e-2)
    assert jnp.allclose(out["hr"], jnp.zeros((B, H), jnp.float32))   # exact zeros

    # Exercise the divisor-free tail-masking path (S=20, tS=8 -> remainder 4) and
    # the feat=None zero-fill path, eagerly (non-jit).
    v2 = jax.random.normal(kv, (B, 20, H), jnp.float32)
    out2 = context_encoder_forward(v2, None, None,
                                   visual_mask, audio_mask, hr_mask, params,
                                   s_tile_target=8)
    out2 = jax.tree_util.tree_map(jax.block_until_ready, out2)
    assert jnp.allclose(out2["visual"], ref(v2, visual_mask), atol=3e-2, rtol=3e-2)
    assert out2["audio"].shape == (B, H) and jnp.all(out2["audio"] == 0.0)

    print("KERNEL_OK")
</pallas_src>

<mosaic_0001>
module attributes {stable_mosaic.version = 11 : i64} {
  func.func @_context_kernel(%arg0: i32, %arg1: i32, %arg2: memref<1xi32, #tpu.memory_space<smem>>, %arg3: memref<2x8x32xf32, #tpu.memory_space<vmem>>, %arg4: memref<2x1xf32, #tpu.memory_space<vmem>>, %arg5: memref<32x128xbf16, #tpu.memory_space<vmem>>, %arg6: memref<1x128xf32, #tpu.memory_space<vmem>>, %arg7: memref<128x32xbf16, #tpu.memory_space<vmem>>, %arg8: memref<1x32xf32, #tpu.memory_space<vmem>>, %arg9: memref<2x32xf32, #tpu.memory_space<vmem>>, %arg10: memref<2x32xf32, #tpu.memory_space<vmem>>) attributes {dimension_semantics = [#tpu.dimension_semantics<parallel>, #tpu.dimension_semantics<arbitrary>], iteration_bounds = array<i64: 1, 2>, scalar_prefetch = 1 : i64, scratch_operands = 1 : i64, tpu.core_type = #tpu.core_type<tc>, window_params = [{transform_indices = @transform_0, window_bounds = array<i64: 2, 8, 32>}, {transform_indices = @transform_1, window_bounds = array<i64: 2, 1>}, {pipeline_mode = #tpu.pipeline_mode<synchronous>, transform_indices = @transform_2, window_bounds = array<i64: 32, 128>}, {pipeline_mode = #tpu.pipeline_mode<synchronous>, transform_indices = @transform_3, window_bounds = array<i64: 1, 128>}, {pipeline_mode = #tpu.pipeline_mode<synchronous>, transform_indices = @transform_4, window_bounds = array<i64: 128, 32>}, {pipeline_mode = #tpu.pipeline_mode<synchronous>, transform_indices = @transform_5, window_bounds = array<i64: 1, 32>}, {transform_indices = @transform_6, window_bounds = array<i64: 2, 32>}]} {
    %0 = arith.index_cast %arg0 : i32 to index
    %1 = memref.load %arg2[%0] : memref<1xi32, #tpu.memory_space<smem>>
    %c0_i32 = arith.constant 0 : i32
    %2 = arith.cmpi ne, %1, %c0_i32 : i32
    %c0_i32_0 = arith.constant 0 : i32
    %3 = arith.cmpi eq, %arg1, %c0_i32_0 : i32
    %4 = arith.extui %3 : i1 to i32
    %c0_i32_1 = arith.constant 0 : i32
    %5 = arith.cmpi ne, %4, %c0_i32_1 : i32
    scf.if %5 {
      %cst = arith.constant 0.000000e+00 : f32
      %11 = vector.broadcast %cst : f32 to vector<2x32xf32>
      %c0 = arith.constant 0 : index
      %c0_4 = arith.constant 0 : index
      %12 = vector.load %arg10[%c0, %c0_4] : memref<2x32xf32, #tpu.memory_space<vmem>>, vector<2x32xf32>
      tpu.vector_store %arg10[%c0, %c0_4], %11 {strides = array<i32>} : memref<2x32xf32, #tpu.memory_space<vmem>>, vector<2x32xf32>,
    } else {
    }
    %6 = arith.extui %2 : i1 to i32
    %c0_i32_2 = arith.constant 0 : i32
    %7 = arith.cmpi ne, %6, %c0_i32_2 : i32
    scf.if %7 {
      %c0 = arith.constant 0 : index
      %c0_4 = arith.constant 0 : index
      %c0_5 = arith.constant 0 : index
      %11 = vector.load %arg3[%c0, %c0_4, %c0_5] : memref<2x8x32xf32, #tpu.memory_space<vmem>>, vector<2x8x32xf32>
      %c0_6 = arith.constant 0 : index
      %c0_7 = arith.constant 0 : index
      %12 = vector.load %arg10[%c0_6, %c0_7] : memref<2x32xf32, #tpu.memory_space<vmem>>, vector<2x32xf32>
      %cst = arith.constant dense<0.000000e+00> : vector<2x32xf32>
      %13 = vector.multi_reduction <add>, %11, %cst [1] : vector<2x8x32xf32> to vector<2x32xf32>
      %14 = arith.addf %12, %13 : vector<2x32xf32>
      %c0_8 = arith.constant 0 : index
      %c0_9 = arith.constant 0 : index
      %15 = vector.load %arg10[%c0_8, %c0_9] : memref<2x32xf32, #tpu.memory_space<vmem>>, vector<2x32xf32>
      tpu.vector_store %arg10[%c0_8, %c0_9], %14 {strides = array<i32>} : memref<2x32xf32, #tpu.memory_space<vmem>>, vector<2x32xf32>,
    } else {
    }
    %c1_i32 = arith.constant 1 : i32
    %8 = arith.cmpi eq, %arg1, %c1_i32 : i32
    %9 = arith.extui %8 : i1 to i32
    %c0_i32_3 = arith.constant 0 : i32
    %10 = arith.cmpi ne, %9, %c0_i32_3 : i32
    scf.if %10 {
      %11 = arith.extui %2 : i1 to i32
      %c0_i32_4 = arith.constant 0 : i32
      %12 = arith.cmpi ne, %11, %c0_i32_4 : i32
      scf.if %12 {
        %c0 = arith.constant 0 : index
        %c0_6 = arith.constant 0 : index
        %16 = vector.load %arg10[%c0, %c0_6] : memref<2x32xf32, #tpu.memory_space<vmem>>, vector<2x32xf32>
        %cst = arith.constant 6.250000e-02 : f32
        %17 = vector.broadcast %cst : f32 to vector<2x32xf32>
        %18 = arith.mulf %16, %17 : vector<2x32xf32>
        %19 = arith.truncf %18 : vector<2x32xf32> to vector<2x32xbf16>
        %c0_7 = arith.constant 0 : index
        %c0_8 = arith.constant 0 : index
        %20 = vector.load %arg5[%c0_7, %c0_8] : memref<32x128xbf16, #tpu.memory_space<vmem>>, vector<32x128xbf16>
        %cst_9 = arith.constant dense<0.000000e+00> : vector<2x128xf32>
        %21 = tpu.matmul %19, %20, %cst_9 {dimension_numbers = #tpu.dot_dimension_numbers<[1], [0], [0], [1], [0, 0, 1, 1], [], []>} : vector<2x32xbf16>, vector<32x128xbf16>, vector<2x128xf32> -> vector<2x128xf32>
        %c0_10 = arith.constant 0 : index
        %c0_11 = arith.constant 0 : index
        %22 = vector.load %arg6[%c0_10, %c0_11] : memref<1x128xf32, #tpu.memory_space<vmem>>, vector<1x128xf32>
        %23 = vector.broadcast %22 : vector<1x128xf32> to vector<2x128xf32>
        %24 = arith.addf %21, %23 : vector<2x128xf32>
        %cst_12 = arith.constant 0.000000e+00 : f32
        %25 = vector.broadcast %cst_12 : f32 to vector<2x128xf32>
        %26 = arith.maximumf %24, %25 : vector<2x128xf32>
        %27 = arith.truncf %26 : vector<2x128xf32> to vector<2x128xbf16>
        %c0_13 = arith.constant 0 : index
        %c0_14 = arith.constant 0 : index
        %28 = vector.load %arg7[%c0_13, %c0_14] : memref<128x32xbf16, #tpu.memory_space<vmem>>, vector<128x32xbf16>
        %cst_15 = arith.constant dense<0.000000e+00> : vector<2x32xf32>
        %29 = tpu.matmul %27, %28, %cst_15 {dimension_numbers = #tpu.dot_dimension_numbers<[1], [0], [0], [1], [0, 0, 1, 1], [], []>} : vector<2x128xbf16>, vector<128x32xbf16>, vector<2x32xf32> -> vector<2x32xf32>
        %c0_16 = arith.constant 0 : index
        %c0_17 = arith.constant 0 : index
        %30 = vector.load %arg8[%c0_16, %c0_17] : memref<1x32xf32, #tpu.memory_space<vmem>>, vector<1x32xf32>
        %31 = vector.broadcast %30 : vector<1x32xf32> to vector<2x32xf32>
        %32 = arith.addf %29, %31 : vector<2x32xf32>
        %c0_18 = arith.constant 0 : index
        %c0_19 = arith.constant 0 : index
        %33 = vector.load %arg4[%c0_18, %c0_19] : memref<2x1xf32, #tpu.memory_space<vmem>>, vector<2x1xf32>
        %34 = vector.broadcast %33 : vector<2x1xf32> to vector<2x32xf32>
        %35 = arith.mulf %32, %34 : vector<2x32xf32>
        %c0_20 = arith.constant 0 : index
        %c0_21 = arith.constant 0 : index
        %36 = vector.load %arg9[%c0_20, %c0_21] : memref<2x32xf32, #tpu.memory_space<vmem>>, vector<2x32xf32>
        tpu.vector_store %arg9[%c0_20, %c0_21], %35 {strides = array<i32>} : memref<2x32xf32, #tpu.memory_space<vmem>>, vector<2x32xf32>,
      } else {
      }
      %true = arith.constant true
      %13 = arith.xori %2, %true : i1
      %14 = arith.extui %13 : i1 to i32
      %c0_i32_5 = arith.constant 0 : i32
      %15 = arith.cmpi ne, %14, %c0_i32_5 : i32
      scf.if %15 {
        %cst = arith.constant 0.000000e+00 : f32
        %16 = vector.broadcast %cst : f32 to vector<2x32xf32>
        %c0 = arith.constant 0 : index
        %c0_6 = arith.constant 0 : index
        %17 = vector.load %arg9[%c0, %c0_6] : memref<2x32xf32, #tpu.memory_space<vmem>>, vector<2x32xf32>
        tpu.vector_store %arg9[%c0, %c0_6], %16 {strides = array<i32>} : memref<2x32xf32, #tpu.memory_space<vmem>>, vector<2x32xf32>,
      } else {
      }
    } else {
    }
    return
  }
  func.func @transform_0(%arg0: i32, %arg1: i32, %arg2: memref<1xi32, #tpu.memory_space<smem>>) -> (i32, i32, i32) {
    %0 = arith.index_cast %arg0 : i32 to index
    %1 = memref.load %arg2[%0] : memref<1xi32, #tpu.memory_space<smem>>
    %c0_i32 = arith.constant 0 : i32
    %2 = arith.cmpi ne, %1, %c0_i32 : i32
    %c0_i32_0 = arith.constant 0 : i32
    %3 = arith.select %2, %arg0, %c0_i32_0 : i32
    %c0_i32_1 = arith.constant 0 : i32
    %4 = arith.select %2, %arg1, %c0_i32_1 : i32
    %c0_i32_2 = arith.constant 0 : i32
    %c0_i32_3 = arith.constant 0 : i32
    return %3, %4, %c0_i32_2 : i32, i32, i32
  }
  func.func @transform_1(%arg0: i32, %arg1: i32, %arg2: memref<1xi32, #tpu.memory_space<smem>>) -> (i32, i32) {
    %c0_i32 = arith.constant 0 : i32
    %c0_i32_0 = arith.constant 0 : i32
    return %arg0, %c0_i32 : i32, i32
  }
  func.func @transform_2(%arg0: i32, %arg1: i32, %arg2: memref<1xi32, #tpu.memory_space<smem>>) -> (i32, i32) {
    %c0_i32 = arith.constant 0 : i32
    %c0_i32_0 = arith.constant 0 : i32
    %c0_i32_1 = arith.constant 0 : i32
    return %c0_i32, %c0_i32_0 : i32, i32
  }
  func.func @transform_3(%arg0: i32, %arg1: i32, %arg2: memref<1xi32, #tpu.memory_space<smem>>) -> (i32, i32) {
    %c0_i32 = arith.constant 0 : i32
    %c0_i32_0 = arith.constant 0 : i32
    %c0_i32_1 = arith.constant 0 : i32
    return %c0_i32, %c0_i32_0 : i32, i32
  }
  func.func @transform_4(%arg0: i32, %arg1: i32, %arg2: memref<1xi32, #tpu.memory_space<smem>>) -> (i32, i32) {
    %c0_i32 = arith.constant 0 : i32
    %c0_i32_0 = arith.constant 0 : i32
    %c0_i32_1 = arith.constant 0 : i32
    return %c0_i32, %c0_i32_0 : i32, i32
  }
  func.func @transform_5(%arg0: i32, %arg1: i32, %arg2: memref<1xi32, #tpu.memory_space<smem>>) -> (i32, i32) {
    %c0_i32 = arith.constant 0 : i32
    %c0_i32_0 = arith.constant 0 : i32
    %c0_i32_1 = arith.constant 0 : i32
    return %c0_i32, %c0_i32_0 : i32, i32
  }
  func.func @transform_6(%arg0: i32, %arg1: i32, %arg2: memref<1xi32, #tpu.memory_space<smem>>) -> (i32, i32) {
    %c0_i32 = arith.constant 0 : i32
    %c0_i32_0 = arith.constant 0 : i32
    return %arg0, %c0_i32 : i32, i32
  }
}

</mosaic_0001>

<llo_original>
// kernel: context_encoder_forward.3
$region0: #{context_encoder_forward.3}
  #allocation0 [shape = 'u32[]', space=smem, size = 0x4, offset = 0x4, fixed_abs, tag = 'smem constant byte address 0x4 - core index']
  #allocation1 [shape = 'u32[144,128]{1,0:T(1,128)}', space=vmem, size = 0x12000, scoped, tag = 'internal scratch']
  #allocation2 [shape = 'f32[2,32]{1,0:T(2,128)}', space=vmem, size = 0x400, scoped, tag = 'scratch operand']
  #allocation3 [shape = 's32[1]{0}', space=sflag, size = 0x4, scoped, tag = 'scoped memory for context_encoder_forward.3']
  #allocation4 [shape = 's32[1]{0:T(128)S(6)}', space=smem, size = 0x200, scoped, tag = 'prefetched SMEM operand 0']
  %s0 = inlined_call_operand.<no memory space> [shape: s32[1], index: 0, kind: input, shape index: {}]
  %s1 = inlined_call_operand.hbm [shape: f32[2,16,32], index: 1, kind: input, shape index: {}]
  %s2 = inlined_call_operand.hbm [shape: f32[2,1], index: 2, kind: input, shape index: {}]
  %s3 = inlined_call_operand.hbm [shape: bf16[32,128], index: 3, kind: input, shape index: {}]
  %s4 = inlined_call_operand.hbm [shape: f32[1,128], index: 4, kind: input, shape index: {}]
  %s5 = inlined_call_operand.hbm [shape: bf16[128,32], index: 5, kind: input, shape index: {}]
  %s6 = inlined_call_operand.hbm [shape: f32[1,32], index: 6, kind: input, shape index: {}]
  %s7 = inlined_call_operand.hbm [shape: f32[2,32], index: 7, kind: output, shape index: {}]
  %s8 = sld [smem:[#allocation0]]
  $region101: #{context_encoder_forward.3} parent=0
    _
  %s10 = ssub.s32 1, %s8
  %s11 = scalar_select 0, %s10, %s8
  %12 = sst [smem:[#allocation4]] %s0
  $region1: #{context_encoder_forward.3} parent=0
    #allocation5 [shape = 'u8[16384]{0}', space=vmem, size = 0x4000, scoped, tag = 'input window, operand 1']
    #allocation6 [shape = 's32[2]{0}', space=sflag, size = 0x8, scoped, tag = 'scoped memory for context_encoder_forward.3']
    #allocation7 [shape = 's32[2]{0}', space=sflag, size = 0x8, scoped, tag = 'scoped memory for context_encoder_forward.3']
    #allocation8 [shape = 'u8[1024]{0}', space=vmem, size = 0x400, scoped, tag = 'input window, operand 2, single buffered']
    #allocation9 [shape = 's32[1]{0}', space=sflag, size = 0x4, scoped, tag = 'scoped memory for context_encoder_forward.3']
    #allocation10 [shape = 'u8[8192]{0}', space=vmem, size = 0x2000, scoped, tag = 'input window, operand 3, single buffered']
    #allocation11 [shape = 'u8[512]{0}', space=vmem, size = 0x400, scoped, tag = 'input window, operand 4, single buffered']
    #allocation12 [shape = 's32[1]{0}', space=sflag, size = 0x4, scoped, tag = 'scoped memory for context_encoder_forward.3']
    #allocation13 [shape = 'u8[32768]{0}', space=vmem, size = 0x8000, scoped, tag = 'input window, operand 5, single buffered']
    #allocation14 [shape = 'u8[512]{0}', space=vmem, size = 0x400, scoped, tag = 'input window, operand 6, single buffered']
    #allocation15 [shape = 's32[1]{0}', space=sflag, size = 0x4, scoped, tag = 'scoped memory for context_encoder_forward.3']
    #allocation16 [shape = 'u8[1024]{0}', space=vmem, size = 0x400, scoped, tag = 'output window, operand 0, single buffered']
    %13 = vsyncpa [#allocation6], 0
    %s14 = scalar_lea.sflag [#allocation6], 1
    %15 = vsyncpa %s14, 0
    %16 = vsyncpa [#allocation9], 0
    %17 = vsyncpa [#allocation12], 0
    %18 = vsyncpa [#allocation15], 0
    %19 = vsyncpa [#allocation7], 0
    loop: start=0, step=1, limit=4
    $region2: #{context_encoder_forward.3} parent=1 // loop_pre_header
      _
    $region3: #{context_encoder_forward.3} parent=1 // loop_header
      %s21 = sphi 0, %s25
      %p22 = scmp.ge.s32.totalorder %s21, 4
      %s28 = sphi 0, %s40
      %s29 = sphi 0, %s36
      %s30 = sphi 0, %s28
      %s31 = sphi 0, %s29
      %s32 = sphi 0, %s30
      %s33 = sphi 0, %s31
      %s53 = sphi 0, %s55
      %s56 = sphi 0, %s53
      %s57 = sphi 0, %s56
      %s73 = sphi 0, %s57
      %s79 = sphi 0, %s81
      %s82 = sphi 0, %s79
      %s83 = sphi 0, %s82
      %s99 = sphi 0, %s83
      %s103 = sphi 0, %s103
      %s105 = sphi 0, %s103
      %s106 = sphi 0, %s105
      %s120 = sphi 0, %s106
      %s124 = sphi 0, %s124
      %s126 = sphi 0, %s124
      %s127 = sphi 0, %s126
      %s141 = sphi 0, %s127
      %s145 = sphi 0, %s145
      %s147 = sphi 0, %s145
      %s148 = sphi 0, %s147
      %s162 = sphi 0, %s148
      %s166 = sphi 0, %s166
      %s168 = sphi 0, %s166
      %s169 = sphi 0, %s168
      %s183 = sphi 0, %s169
      %s189 = sphi 0, %s191
      %s192 = sphi 0, %s189
      %s193 = sphi 0, %s192
      %s209 = sphi 0, %s193
    $region4: #{context_encoder_forward.3} parent=1 // loop_header_branch
      %24 = sbr.rel (%p22) target = $region8
    $region5: #{context_encoder_forward.3} parent=1 // loop_body
      %s26 = ssub.s32 %s21, 1
      %s27 = ssub.s32 %s21, 2
      %s34 = sadd.s32 1, %s29
      %p35 = scmp.ge.s32.totalorder %s34, 2
      %s36 = scalar_select %p35, 0, %s34
      %s37 = sadd.s32 1, %s28
      %s38 = scalar_select %p35, %s37, %s28
      %p39 = scmp.ge.s32.totalorder %s38, 1
      %s40 = scalar_select %p39, 0, %s38
      %s41 = sld [smem:[#allocation4 + %s28]]
      %p42 = scmp.ne.s32.totalorder %s41, 0
      %s43 = scalar_select %p42, %s28, 0
      %s44 = scalar_select %p42, %s29, 0
      %s45 = sld [smem:[#allocation4 + %s40]]
      %p46 = scmp.ne.s32.totalorder %s45, 0
      %s47 = scalar_select %p46, %s40, 0
      %s48 = scalar_select %p46, %s36, 0
      %s49 = ssub.s32 %s43, %s47
      %s50 = ssub.s32 %s44, %s48
      %s51 = sor.u32 %s49, %s50
      %p52 = scmp.eq.s32.totalorder %s51, 0
      %s54 = sadd.s32 %s53, 1
      %s55 = scalar_select %p52, %s53, %s54
      %p58 = pneg %p52
      %p59 = scmp.eq.s32.totalorder %s21, 1
      %p60 = por %p58, %p59
      %p61 = scmp.ne.s32.totalorder %s53, %s56
      %p62 = scmp.eq.s32.totalorder %s21, 0
      %p63 = por %p61, %p62
      %p64 = scmp.ne.s32.totalorder %s53, %s56
      %p65 = scmp.eq.s32.totalorder %s26, 1
      %p66 = por %p64, %p65
      %p67 = scmp.ne.s32.totalorder %s56, %s57
      %p68 = scmp.eq.s32.totalorder %s26, 0
      %p69 = por %p67, %p68
      %p70 = scmp.ne.s32.totalorder %s56, %s57
      %p71 = scmp.eq.s32.totalorder %s27, 1
      %p72 = por %p70, %p71
      %p74 = scmp.ne.s32.totalorder %s57, %s73
      %p75 = scmp.eq.s32.totalorder %s27, 0
      %p76 = por %p74, %p75
      %s77 = ssub.s32 %s28, %s40
      %p78 = scmp.eq.s32.totalorder %s77, 0
      %s80 = sadd.s32 %s79, 1
      %s81 = scalar_select %p78, %s79, %s80
      %p84 = pneg %p78
      %p85 = scmp.eq.s32.totalorder %s21, 1
      %p86 = por %p84, %p85
      %p87 = scmp.ne.s32.totalorder %s79, %s82
      %p88 = scmp.eq.s32.totalorder %s21, 0
      %p89 = por %p87, %p88
      %p90 = scmp.ne.s32.totalorder %s79, %s82
      %p91 = scmp.eq.s32.totalorder %s26, 1
      %p92 = por %p90, %p91
      %p93 = scmp.ne.s32.totalorder %s82, %s83
      %p94 = scmp.eq.s32.totalorder %s26, 0
      %p95 = por %p93, %p94
      %p96 = scmp.ne.s32.totalorder %s82, %s83
      %p97 = scmp.eq.s32.totalorder %s27, 1
      %p98 = por %p96, %p97
      %p100 = scmp.ne.s32.totalorder %s83, %s99
      %p101 = scmp.eq.s32.totalorder %s27, 0
      %p102 = por %p100, %p101
      %s104 = sadd.s32 %s103, 1
      %p107 = scmp.eq.s32.totalorder %s21, 1
      %p108 = scmp.ne.s32.totalorder %s103, %s105
      %p109 = scmp.eq.s32.totalorder %s21, 0
      %p110 = por %p108, %p109
      %p111 = scmp.ne.s32.totalorder %s103, %s105
      %p112 = scmp.eq.s32.totalorder %s26, 1
      %p113 = por %p111, %p112
      %p114 = scmp.ne.s32.totalorder %s105, %s106
      %p115 = scmp.eq.s32.totalorder %s26, 0
      %p116 = por %p114, %p115
      %p117 = scmp.ne.s32.totalorder %s105, %s106
      %p118 = scmp.eq.s32.totalorder %s27, 1
      %p119 = por %p117, %p118
      %p121 = scmp.ne.s32.totalorder %s106, %s120
      %p122 = scmp.eq.s32.totalorder %s27, 0
      %p123 = por %p121, %p122
      %s125 = sadd.s32 %s124, 1
      %p128 = scmp.eq.s32.totalorder %s21, 1
      %p129 = scmp.ne.s32.totalorder %s124, %s126
      %p130 = scmp.eq.s32.totalorder %s21, 0
      %p131 = por %p129, %p130
      %p132 = scmp.ne.s32.totalorder %s124, %s126
      %p133 = scmp.eq.s32.totalorder %s26, 1
      %p134 = por %p132, %p133
      %p135 = scmp.ne.s32.totalorder %s126, %s127
      %p136 = scmp.eq.s32.totalorder %s26, 0
      %p137 = por %p135, %p136
      %p138 = scmp.ne.s32.totalorder %s126, %s127
      %p139 = scmp.eq.s32.totalorder %s27, 1
      %p140 = por %p138, %p139
      %p142 = scmp.ne.s32.totalorder %s127, %s141
      %p143 = scmp.eq.s32.totalorder %s27, 0
      %p144 = por %p142, %p143
      %s146 = sadd.s32 %s145, 1
      %p149 = scmp.eq.s32.totalorder %s21, 1
      %p150 = scmp.ne.s32.totalorder %s145, %s147
      %p151 = scmp.eq.s32.totalorder %s21, 0
      %p152 = por %p150, %p151
      %p153 = scmp.ne.s32.totalorder %s145, %s147
      %p154 = scmp.eq.s32.totalorder %s26, 1
      %p155 = por %p153, %p154
      %p156 = scmp.ne.s32.totalorder %s147, %s148
      %p157 = scmp.eq.s32.totalorder %s26, 0
      %p158 = por %p156, %p157
      %p159 = scmp.ne.s32.totalorder %s147, %s148
      %p160 = scmp.eq.s32.totalorder %s27, 1
      %p161 = por %p159, %p160
      %p163 = scmp.ne.s32.totalorder %s148, %s162
      %p164 = scmp.eq.s32.totalorder %s27, 0
      %p165 = por %p163, %p164
      %s167 = sadd.s32 %s166, 1
      %p170 = scmp.eq.s32.totalorder %s21, 1
      %p171 = scmp.ne.s32.totalorder %s166, %s168
      %p172 = scmp.eq.s32.totalorder %s21, 0
      %p173 = por %p171, %p172
      %p174 = scmp.ne.s32.totalorder %s166, %s168
      %p175 = scmp.eq.s32.totalorder %s26, 1
      %p176 = por %p174, %p175
      %p177 = scmp.ne.s32.totalorder %s168, %s169
      %p178 = scmp.eq.s32.totalorder %s26, 0
      %p179 = por %p177, %p178
      %p180 = scmp.ne.s32.totalorder %s168, %s169
      %p181 = scmp.eq.s32.totalorder %s27, 1
      %p182 = por %p180, %p181
      %p184 = scmp.ne.s32.totalorder %s169, %s183
      %p185 = scmp.eq.s32.totalorder %s27, 0
      %p186 = por %p184, %p185
      %s187 = ssub.s32 %s28, %s40
      %p188 = scmp.eq.s32.totalorder %s187, 0
      %s190 = sadd.s32 %s189, 1
      %s191 = scalar_select %p188, %s189, %s190
      %p194 = pneg %p188
      %p195 = scmp.eq.s32.totalorder %s21, 1
      %p196 = por %p194, %p195
      %p197 = scmp.ne.s32.totalorder %s189, %s192
      %p198 = scmp.eq.s32.totalorder %s21, 0
      %p199 = por %p197, %p198
      %p200 = scmp.ne.s32.totalorder %s189, %s192
      %p201 = scmp.eq.s32.totalorder %s26, 1
      %p202 = por %p200, %p201
      %p203 = scmp.ne.s32.totalorder %s192, %s193
      %p204 = scmp.eq.s32.totalorder %s26, 0
      %p205 = por %p203, %p204
      %p206 = scmp.ne.s32.totalorder %s192, %s193
      %p207 = scmp.eq.s32.totalorder %s27, 1
      %p208 = por %p206, %p207
      %p210 = scmp.ne.s32.totalorder %s193, %s209
      %p211 = scmp.eq.s32.totalorder %s27, 0
      %p212 = por %p210, %p211
      %p213 = scmp.le.s32.totalorder 1, %s21
      %p214 = scmp.lt.s32.totalorder %s21, 3
      %p215 = pnand %p213, %p214
      %p216 = pneg %p215
      // Predicated region
      $region9: #{context_encoder_forward.3} parent=5 // pred_check
        _
      $region10: #{context_encoder_forward.3} parent=5 // pred_check_branch
        %218 = sbr.rel (%p215) target = $region12
      $region11: #{context_encoder_forward.3} parent=5 // pred_region
        %s219 = ssub.s32 %s21, 1
        // Predicated region
        $region13: #{context_encoder_forward.3} parent=11 // pred_check
          %p220 = pneg %p95
        $region14: #{context_encoder_forward.3} parent=11 // pred_check_branch
          %222 = sbr.rel (%p220) target = $region16
        $region15: #{context_encoder_forward.3} parent=11 // pred_region
          %s224 = ssub.s32 32, 32
          %225 = vsyncadd [#allocation9], %s224
          %s226 = smul.addr %s30, 32
          %s227 = scalar_lea.hbm %s2, %s226
          %s229 = sshll.u32 [#allocation8], 4
          %s230 = int_to_ptr.vmem [resolvable:$true] %s229
          %232 = dma.hbm_to_vmem [thread:$0]  %s227, 32, %s230, [#allocation9]
        $region16: #{context_encoder_forward.3} parent=11 // pred_fallthru
          _
        // Predicated region
        $region17: #{context_encoder_forward.3} parent=11 // pred_check
          %p233 = pneg %p116
        $region18: #{context_encoder_forward.3} parent=11 // pred_check_branch
          %235 = sbr.rel (%p233) target = $region20
        $region19: #{context_encoder_forward.3} parent=11 // pred_region
          %s237 = ssub.s32 256, 256
          %238 = vsyncadd [#allocation9], %s237
          %s239 = sshll.u32 [#allocation10], 4
          %s240 = int_to_ptr.vmem [resolvable:$true] %s239
          %245 = dma.hbm_to_vmem [thread:$0]  %s3, 256, %s240, [#allocation9], 64, 64, 4
        $region20: #{context_encoder_forward.3} parent=11 // pred_fallthru
          _
        // Predicated region
        $region21: #{context_encoder_forward.3} parent=11 // pred_check
          %p246 = pneg %p137
        $region22: #{context_encoder_forward.3} parent=11 // pred_check_branch
          %248 = sbr.rel (%p246) target = $region24
        $region23: #{context_encoder_forward.3} parent=11 // pred_region
          %s250 = ssub.s32 16, 16
          %251 = vsyncadd [#allocation12], %s250
          %s253 = sshll.u32 [#allocation11], 4
          %s254 = int_to_ptr.vmem [resolvable:$true] %s253
          %256 = dma.hbm_to_vmem [thread:$0]  %s4, 16, %s254, [#allocation12]
        $region24: #{context_encoder_forward.3} parent=11 // pred_fallthru
          _
        // Predicated region
        $region25: #{context_encoder_forward.3} parent=11 // pred_check
          %p257 = pneg %p158
        $region26: #{context_encoder_forward.3} parent=11 // pred_check_branch
          %259 = sbr.rel (%p257) target = $region28
        $region27: #{context_encoder_forward.3} parent=11 // pred_region
          %s261 = ssub.s32 1024, 1024
          %262 = vsyncadd [#allocation12], %s261
          %s263 = sshll.u32 [#allocation13], 4
          %s264 = int_to_ptr.vmem [resolvable:$true] %s263
          %269 = dma.hbm_to_vmem [thread:$0]  %s5, 1024, %s264, [#allocation12], 64, 64, 4
        $region28: #{context_encoder_forward.3} parent=11 // pred_fallthru
          _
        // Predicated region
        $region29: #{context_encoder_forward.3} parent=11 // pred_check
          %p270 = pneg %p179
        $region30: #{context_encoder_forward.3} parent=11 // pred_check_branch
          %272 = sbr.rel (%p270) target = $region32
        $region31: #{context_encoder_forward.3} parent=11 // pred_region
          %s274 = ssub.s32 16, 16
          %275 = vsyncadd [#allocation15], %s274
          %s277 = sshll.u32 [#allocation14], 4
          %s278 = int_to_ptr.vmem [resolvable:$true] %s277
          %280 = dma.hbm_to_vmem [thread:$0]  %s6, 16, %s278, [#allocation15]
        $region32: #{context_encoder_forward.3} parent=11 // pred_fallthru
          _
      $region12: #{context_encoder_forward.3} parent=5 // pred_fallthru
        _
      %p281 = scmp.lt.s32.totalorder %s21, 2
      // Predicated region
      $region33: #{context_encoder_forward.3} parent=5 // pred_check
        %p282 = pneg %p281
      $region34: #{context_encoder_forward.3} parent=5 // pred_check_branch
        %284 = sbr.rel (%p282) target = $region36
      $region35: #{context_encoder_forward.3} parent=5 // pred_region
        // Predicated region
        $region37: #{context_encoder_forward.3} parent=35 // pred_check
          %p285 = pneg %p63
        $region38: #{context_encoder_forward.3} parent=35 // pred_check_branch
          %287 = sbr.rel (%p285) target = $region40
        $region39: #{context_encoder_forward.3} parent=35 // pred_region
          %s288 = sand.u32 %s53, 1
          %s289 = scalar_lea.sflag [#allocation6], %s288
          %s290 = sand.u32 %s53, 1
          %s291 = smul.addr %s290, 16
          %s292 = scalar_lea.vmem [#allocation5], %s291
          %s293 = sld [smem:[#allocation4 + %s28]]
          %p294 = scmp.ne.s32.totalorder %s293, 0
          %s295 = scalar_select %p294, %s28, 0
          %s296 = scalar_select %p294, %s29, 0
          %s297 = smul.u32 2, %s295
          %s299 = ssub.s32 256, 256
          %300 = vsyncadd %s289, %s299
          %s301 = smul.addr %s297, 2
          %s302 = sadd.s32 %s296, %s301
          %s303 = smul.addr %s302, 128
          %s304 = scalar_lea.hbm %s1, %s303
          %s305 = sshll.u32 %s292, 4
          %s306 = int_to_ptr.vmem [resolvable:$true] %s305
          %311 = dma.hbm_to_vmem [thread:$0]  %s304, 256, %s306, %s289, 256, 128, 8
        $region40: #{context_encoder_forward.3} parent=35 // pred_fallthru
          _
      $region36: #{context_encoder_forward.3} parent=5 // pred_fallthru
        _
      %p312 = scmp.le.s32.totalorder 1, %s21
      %p313 = scmp.lt.s32.totalorder %s21, 3
      %p314 = pnand %p312, %p313
      %p315 = pneg %p314
      // Predicated region
      $region41: #{context_encoder_forward.3} parent=5 // pred_check
        _
      $region42: #{context_encoder_forward.3} parent=5 // pred_check_branch
        %317 = sbr.rel (%p314) target = $region44
      $region43: #{context_encoder_forward.3} parent=5 // pred_region
        %s318 = ssub.s32 %s21, 1
        %s319 = sand.u32 %s56, 1
        %s320 = scalar_lea.sflag [#allocation6], %s319
        %s321 = sand.u32 %s56, 1
        %s322 = smul.addr %s321, 16
        %s323 = scalar_lea.vmem [#allocation5], %s322
        // Predicated region
        $region45: #{context_encoder_forward.3} parent=43 // pred_check
          %p324 = pneg %p69
        $region46: #{context_encoder_forward.3} parent=43 // pred_check_branch
          %326 = sbr.rel (%p324) target = $region48
        $region47: #{context_encoder_forward.3} parent=43 // pred_region
          %327 = dma.done %s320, 256
        $region48: #{context_encoder_forward.3} parent=43 // pred_fallthru
          _
        // Predicated region
        $region49: #{context_encoder_forward.3} parent=43 // pred_check
          %p328 = pneg %p95
        $region50: #{context_encoder_forward.3} parent=43 // pred_check_branch
          %330 = sbr.rel (%p328) target = $region52
        $region51: #{context_encoder_forward.3} parent=43 // pred_region
          %331 = dma.done [#allocation9], 32
        $region52: #{context_encoder_forward.3} parent=43 // pred_fallthru
          _
        // Predicated region
        $region53: #{context_encoder_forward.3} parent=43 // pred_check
          %p332 = pneg %p116
        $region54: #{context_encoder_forward.3} parent=43 // pred_check_branch
          %334 = sbr.rel (%p332) target = $region56
        $region55: #{context_encoder_forward.3} parent=43 // pred_region
          %335 = dma.done [#allocation9], 256
        $region56: #{context_encoder_forward.3} parent=43 // pred_fallthru
          _
        // Predicated region
        $region57: #{context_encoder_forward.3} parent=43 // pred_check
          %p336 = pneg %p137
        $region58: #{context_encoder_forward.3} parent=43 // pred_check_branch
          %338 = sbr.rel (%p336) target = $region60
        $region59: #{context_encoder_forward.3} parent=43 // pred_region
          %339 = dma.done [#allocation12], 16
        $region60: #{context_encoder_forward.3} parent=43 // pred_fallthru
          _
        // Predicated region
        $region61: #{context_encoder_forward.3} parent=43 // pred_check
          %p340 = pneg %p158
        $region62: #{context_encoder_forward.3} parent=43 // pred_check_branch
          %342 = sbr.rel (%p340) target = $region64
        $region63: #{context_encoder_forward.3} parent=43 // pred_region
          %343 = dma.done [#allocation12], 1024
        $region64: #{context_encoder_forward.3} parent=43 // pred_fallthru
          _
        // Predicated region
        $region65: #{context_encoder_forward.3} parent=43 // pred_check
          %p344 = pneg %p179
        $region66: #{context_encoder_forward.3} parent=43 // pred_check_branch
          %346 = sbr.rel (%p344) target = $region68
        $region67: #{context_encoder_forward.3} parent=43 // pred_region
          %347 = dma.done [#allocation15], 16
        $region68: #{context_encoder_forward.3} parent=43 // pred_fallthru
          _
        %s348 = sand.u32 %s56, 1
        %s349 = scalar_lea.sflag [#allocation6], %s348
        %s350 = sand.u32 %s56, 1
        %s351 = smul.addr %s350, 16
        %s352 = scalar_lea.vmem [#allocation5], %s351
        %p353 = pneg %p69
        %p354 = pneg %p66
        %p355 = pneg %p95
        %p356 = pneg %p92
        %p357 = pneg %p116
        %p358 = pneg %p113
        %p359 = pneg %p137
        %p360 = pneg %p134
        %p361 = pneg %p158
        %p362 = pneg %p155
        %p363 = pneg %p179
        %p364 = pneg %p176
        %p365 = pneg %p205
        %p366 = pneg %p202
        %s367 = sld [smem:[#allocation4 + %s30]]
        %p368 = scmp.ne.s32.totalorder %s367, 0
        %s369 = scalar_select %p368, %s30, 0
        %s370 = scalar_select %p368, %s31, 0
        %s371 = smul.u32 2, %s369
        %s373 = sld [smem:[#allocation4 + %s30]]
        %p374 = scmp.ne.s32.totalorder %s373, 0
        %p375 = scmp.eq.s32.totalorder %s31, 0
        // Predicated region
        $region69: #{context_encoder_forward.3} parent=43 // pred_check
          %p376 = pneg %p375
        $region70: #{context_encoder_forward.3} parent=43 // pred_check_branch
          %378 = sbr.rel (%p376) target = $region72
        $region71: #{context_encoder_forward.3} parent=43 // pred_region
          %vm379 = vcmask 254976
          %380 = vst.msk [vmem:[#allocation2] sm:$0x3] %vm379, 0.0
        $region72: #{context_encoder_forward.3} parent=43 // pred_fallthru
          _
        // Predicated region
        $region73: #{context_encoder_forward.3} parent=43 // pred_check
          %p381 = pneg %p374
        $region74: #{context_encoder_forward.3} parent=43 // pred_check_branch
          %383 = sbr.rel (%p381) target = $region76
        $region75: #{context_encoder_forward.3} parent=43 // pred_region
          %v384 = vld [vmem:[%s323] sm:$0xff]
          %v385 = vld [vmem:[%s323 + $0x8] sm:$0xff]
          %v386 = vld [vmem:[#allocation2] sm:$0x3]
          %vm387 = vcmask 261120
          %v388 = vsel %vm387, %v384, 0.0
          %v389 = vrot.slane %v388, 4
          %v390 = vadd.f32 %v388, %v389
          %v391 = vrot.slane %v390, 2
          %v392 = vadd.f32 %v390, %v391
          %v393 = vrot.slane %v392, 1
          %v394 = vadd.f32 %v392, %v393
          %v395 = vsel %vm387, %v385, 0.0
          %v396 = vrot.slane %v395, 4
          %v397 = vadd.f32 %v395, %v396
          %v398 = vrot.slane %v397, 2
          %v399 = vadd.f32 %v397, %v398
          %v400 = vrot.slane %v399, 1
          %v401 = vadd.f32 %v399, %v400
          %vm404 = vcmask 1041409
          %v405 = vsel %vm404, %v401, %v394
          %v407 = vadd.f32 %v386, %v405
          %vm408 = vcmask 254976
          %409 = vst.msk [vmem:[#allocation2] sm:$0x3] %vm408, %v407
        $region76: #{context_encoder_forward.3} parent=43 // pred_fallthru
          _
        %p410 = scmp.eq.s32.totalorder %s31, 1
        // Predicated region
        $region77: #{context_encoder_forward.3} parent=43 // pred_check
          %p411 = pneg %p410
        $region78: #{context_encoder_forward.3} parent=43 // pred_check_branch
          %413 = sbr.rel (%p411) target = $region80
        $region79: #{context_encoder_forward.3} parent=43 // pred_region
          // Predicated region
          $region81: #{context_encoder_forward.3} parent=79 // pred_check
            %p414 = pneg %p374
          $region82: #{context_encoder_forward.3} parent=79 // pred_check_branch
            %416 = sbr.rel (%p414) target = $region84
          $region83: #{context_encoder_forward.3} parent=79 // pred_region
            %v417 = vld [vmem:[#allocation2] sm:$0x3]
            %v418 = vmul.f32 %v417, 0.0625
            %v419 = vpack.c.bf16 %v418, %v418
            %v420 = vld [vmem:[#allocation10] sm:$0xf]
            %v421 = vld [vmem:[#allocation10 + $0x4] sm:$0xf]
            %v422 = vld [vmem:[#allocation10 + $0x8] sm:$0xf]
            %v423 = vld [vmem:[#allocation10 + $0xc] sm:$0xf]
            %v424 = vld [vmem:[#allocation11] sm:$0x1]
            %v426 = vlaneseq
            %v427 = vshrl.u32 %v426, 7
            %v428 = vsub.s32 0, %v427
            %v429 = vrot.slane %v424, %v428
            %v435 = vunpack.c.l.b16 %v420
            %v436 = vunpack.c.l.b16 %v421
            %v437 = vunpack.c.l.b16 %v422
            %v438 = vunpack.c.l.b16 %v423
            %v439 = vpack.c.b16 %v436, %v435
            %v440 = vpack.c.b16 %v438, %v437
            %vm443 = vcmask 261120
            %v445 = vsel %vm443, %v419, 0
            %447 = vmatprep.subr.bf16.mxu0 0
            %448 = vmatpush1.bf16.msra.mxu0 %v439
            %449 = vmatprep.subr.bf16.mxu0 0
            %450 = vmatpush1.bf16.msra.mxu0 %v440
            %451 = vmatprep.subr.bf16.mxu0 0
            %452 = vmatpush1.bf16.msra.mxu0 0
            %453 = vmatprep.subr.bf16.mxu0 0
            %454 = vmatpush1.bf16.msra.mxu0 0
            %455 = vmatprep.subr.bf16.mxu0 0
            %456 = vmatpush1.bf16.msra.mxu0 0
            %457 = vmatprep.subr.bf16.mxu0 0
            %458 = vmatpush1.bf16.msra.mxu0 0
            %459 = vmatprep.subr.bf16.mxu0 0
            %460 = vmatpush1.bf16.msra.mxu0 0
            %461 = vmatprep.subr.bf16.mxu0 0
            %462 = vmatpush1.bf16.msra.mxu0 0
            %463 = vmatprep.subr.bf16.mxu0 0
            %464 = vmatpush1.bf16.msra.mxu0 0
            %465 = vmatprep.subr.bf16.mxu0 0
            %466 = vmatpush1.bf16.msra.mxu0 0
            %467 = vmatprep.subr.bf16.mxu0 0
            %468 = vmatpush1.bf16.msra.mxu0 0
            %469 = vmatprep.subr.bf16.mxu0 0
            %470 = vmatpush1.bf16.msra.mxu0 0
            %471 = vmatprep.subr.bf16.mxu0 0
            %472 = vmatpush1.bf16.msra.mxu0 0
            %473 = vmatprep.subr.bf16.mxu0 0
            %474 = vmatpush1.bf16.msra.mxu0 0
            %475 = vmatprep.subr.bf16.mxu0 0
            %476 = vmatpush1.bf16.msra.mxu0 0
            %477 = vmatprep.subr.bf16.mxu0 0
            %478 = vmatpush1.bf16.msra.mxu0 0
            %479 = vmatprep.mubr.bf16.mxu0 0
            %480 = vmatmul.mubr.bf16.gmra.mrb[0].mxu0 %v445
            %v481 = vpop.f32.mrb[0].mxu0
            %v482 = vadd.f32 %v429, %v481
            %v483 = vpop.f32.mrb[0].mxu0
            %v484 = vpop.f32.mrb[0].mxu0
            %v485 = vpop.f32.mrb[0].mxu0
            %486 = vdwg.mxu0
            %v487 = vmax.f32 %v482, 0.0
            %v488 = vpack.c.bf16 %v487, %v487
            %v489 = vld [vmem:[#allocation13] sm:$0xf]
            %v490 = vld [vmem:[#allocation13 + $0x4] sm:$0xf]
            %v491 = vld [vmem:[#allocation13 + $0x8] sm:$0xf]
            %v492 = vld [vmem:[#allocation13 + $0xc] sm:$0xf]
            %v493 = vld [vmem:[#allocation13 + $0x10] sm:$0xf]
            %v494 = vld [vmem:[#allocation13 + $0x14] sm:$0xf]
            %v495 = vld [vmem:[#allocation13 + $0x18] sm:$0xf]
            %v496 = vld [vmem:[#allocation13 + $0x1c] sm:$0xf]
            %v497 = vld [vmem:[#allocation13 + $0x20] sm:$0xf]
            %v498 = vld [vmem:[#allocation13 + $0x24] sm:$0xf]
            %v499 = vld [vmem:[#allocation13 + $0x28] sm:$0xf]
            %v500 = vld [vmem:[#allocation13 + $0x2c] sm:$0xf]
            %v501 = vld [vmem:[#allocation13 + $0x30] sm:$0xf]
            %v502 = vld [vmem:[#allocation13 + $0x34] sm:$0xf]
            %v503 = vld [vmem:[#allocation13 + $0x38] sm:$0xf]
            %v504 = vld [vmem:[#allocation13 + $0x3c] sm:$0xf]
            %v505 = vld [vmem:[#allocation14] sm:$0x1]
            %v507 = vlaneseq
            %v508 = vshrl.u32 %v507, 7
            %v509 = vsub.s32 0, %v508
            %v510 = vrot.slane %v505, %v509
            %v528 = vunpack.c.l.b16 %v489
            %v529 = vunpack.c.l.b16 %v490
            %v530 = vunpack.c.l.b16 %v491
            %v531 = vunpack.c.l.b16 %v492
            %v532 = vunpack.c.l.b16 %v493
            %v533 = vunpack.c.l.b16 %v494
            %v534 = vunpack.c.l.b16 %v495
            %v535 = vunpack.c.l.b16 %v496
            %v536 = vunpack.c.l.b16 %v497
            %v537 = vunpack.c.l.b16 %v498
            %v538 = vunpack.c.l.b16 %v499
            %v539 = vunpack.c.l.b16 %v500
            %v540 = vunpack.c.l.b16 %v501
            %v541 = vunpack.c.l.b16 %v502
            %v542 = vunpack.c.l.b16 %v503
            %v543 = vunpack.c.l.b16 %v504
            %v544 = vpack.c.b16 %v529, %v528
            %v545 = vpack.c.b16 %v531, %v530
            %v546 = vpack.c.b16 %v533, %v532
            %v547 = vpack.c.b16 %v535, %v534
            %v548 = vpack.c.b16 %v537, %v536
            %v549 = vpack.c.b16 %v539, %v538
            %v550 = vpack.c.b16 %v541, %v540
            %v551 = vpack.c.b16 %v543, %v542
            %560 = vmatprep.subr.bf16.mxu0 0
            %561 = vmatpush1.bf16.msra.mxu0 %v544
            %562 = vmatprep.subr.bf16.mxu0 0
            %563 = vmatpush1.bf16.msra.mxu0 %v545
            %564 = vmatprep.subr.bf16.mxu0 0
            %565 = vmatpush1.bf16.msra.mxu0 %v546
            %566 = vmatprep.subr.bf16.mxu0 0
            %567 = vmatpush1.bf16.msra.mxu0 %v547
            %568 = vmatprep.subr.bf16.mxu0 0
            %569 = vmatpush1.bf16.msra.mxu0 %v548
            %570 = vmatprep.subr.bf16.mxu0 0
            %571 = vmatpush1.bf16.msra.mxu0 %v549
            %572 = vmatprep.subr.bf16.mxu0 0
            %573 = vmatpush1.bf16.msra.mxu0 %v550
            %574 = vmatprep.subr.bf16.mxu0 0
            %575 = vmatpush1.bf16.msra.mxu0 %v551
            %576 = vmatprep.subr.bf16.mxu0 0
            %577 = vmatpush1.bf16.msra.mxu0 0
            %578 = vmatprep.subr.bf16.mxu0 0
            %579 = vmatpush1.bf16.msra.mxu0 0
            %580 = vmatprep.subr.bf16.mxu0 0
            %581 = vmatpush1.bf16.msra.mxu0 0
            %582 = vmatprep.subr.bf16.mxu0 0
            %583 = vmatpush1.bf16.msra.mxu0 0
            %584 = vmatprep.subr.bf16.mxu0 0
            %585 = vmatpush1.bf16.msra.mxu0 0
            %586 = vmatprep.subr.bf16.mxu0 0
            %587 = vmatpush1.bf16.msra.mxu0 0
            %588 = vmatprep.subr.bf16.mxu0 0
            %589 = vmatpush1.bf16.msra.mxu0 0
            %590 = vmatprep.subr.bf16.mxu0 0
            %591 = vmatpush1.bf16.msra.mxu0 0
            %592 = vmatprep.mubr.bf16.mxu0 0
            %593 = vmatmul.mubr.bf16.gmra.mrb[0].mxu0 %v488
            %v594 = vpop.f32.mrb[0].mxu0
            %v595 = vadd.f32 %v510, %v594
            %v596 = vpop.f32.mrb[0].mxu0
            %v597 = vpop.f32.mrb[0].mxu0
            %v598 = vpop.f32.mrb[0].mxu0
            %599 = vdwg.mxu0
            %v600 = vld [vmem:[#allocation8] sm:$0x3]
            %602 = vset.pattern.permute.xlu0 0
            %603 = vperm.xlu0 %602, %v600
            %v604 = vpop.permute.xlu0 %603
            %v606 = vmul.f32 %v595, %v604
            %vm607 = vcmask 254976
            %608 = vst.msk [vmem:[#allocation16] sm:$0x3] %vm607, %v606
          $region84: #{context_encoder_forward.3} parent=79 // pred_fallthru
            _
          %p609 = scmp.eq.s32.totalorder %s373, 0
          // Predicated region
          $region85: #{context_encoder_forward.3} parent=79 // pred_check
            %p610 = pneg %p609
          $region86: #{context_encoder_forward.3} parent=79 // pred_check_branch
            %612 = sbr.rel (%p610) target = $region88
          $region87: #{context_encoder_forward.3} parent=79 // pred_region
            %vm613 = vcmask 254976
            %614 = vst.msk [vmem:[#allocation16] sm:$0x3] %vm613, 0.0
          $region88: #{context_encoder_forward.3} parent=79 // pred_fallthru
            _
        $region80: #{context_encoder_forward.3} parent=43 // pred_fallthru
          _
        // Predicated region
        $region89: #{context_encoder_forward.3} parent=43 // pred_check
          %p615 = pneg %p202
        $region90: #{context_encoder_forward.3} parent=43 // pred_check_branch
          %617 = sbr.rel (%p615) target = $region92
        $region91: #{context_encoder_forward.3} parent=43 // pred_region
          %s619 = ssub.s32 32, 32
          %620 = vsyncadd [#allocation7], %s619
          %s621 = smul.addr %s30, 32
          %s622 = scalar_lea.hbm %s7, %s621
          %s624 = sshll.u32 [#allocation16], 4
          %s625 = int_to_ptr.vmem [resolvable:$true] %s624
          %627 = dma.vmem_to_hbm [thread:$0]  %s625, 32, %s622, [#allocation7]
        $region92: #{context_encoder_forward.3} parent=43 // pred_fallthru
          _
        // Predicated region
        $region93: #{context_encoder_forward.3} parent=43 // pred_check
          %p628 = pneg %p202
        $region94: #{context_encoder_forward.3} parent=43 // pred_check_branch
          %630 = sbr.rel (%p628) target = $region96
        $region95: #{context_encoder_forward.3} parent=43 // pred_region
          %631 = dma.done [#allocation7], 32
        $region96: #{context_encoder_forward.3} parent=43 // pred_fallthru
          _
      $region44: #{context_encoder_forward.3} parent=5 // pred_fallthru
        _
      %p632 = scmp.le.s32.totalorder 2, %s21
      // Predicated region
      $region97: #{context_encoder_forward.3} parent=5 // pred_check
        %p633 = pneg %p632
      $region98: #{context_encoder_forward.3} parent=5 // pred_check_branch
        %635 = sbr.rel (%p633) target = $region100
      $region99: #{context_encoder_forward.3} parent=5 // pred_region
        %s636 = ssub.s32 %s21, 2
      $region100: #{context_encoder_forward.3} parent=5 // pred_fallthru
        _
    $region6: #{context_encoder_forward.3} parent=1 // loop_footer
      %s25 = sadd.s32 1, %s21
    $region7: #{context_encoder_forward.3} parent=1 // loop_footer_branch
      %20 = sbr.rel target = $region3
    $region8: #{context_encoder_forward.3} parent=1 // loop_exit
      _
    %637 = vsyncpa [#allocation6], 1
    %s638 = scalar_lea.sflag [#allocation6], 1
    %639 = vsyncpa %s638, 1
    %640 = vsyncpa [#allocation9], 1
    %641 = vsyncpa [#allocation12], 1
    %642 = vsyncpa [#allocation15], 1
    %643 = vsyncpa [#allocation7], 1
    %s644 = scalar_lea.sflag [#allocation7], 1
    %645 = vsyncpa %s644, 1

</llo_original>
